<compile_context>
chip_gen: v7x
topology: tpu7x:2x2x1
jax: 0.10.0
libtpu: 0.0.40
codegen_flags: <defaults>
</compile_context>

<pallas_src>
import functools
import math

import jax
import jax.numpy as jnp
from jax import lax
from jax.experimental import pallas as pl
from jax.experimental.pallas import tpu as pltpu


_ROW_TILE = 8  # sublane tile height; 3 accumulators * (8, L<=768) stay in vregs


def _round_up(x, m):
    return ((x + m - 1) // m) * m


def _choose_packing(N, Wp, target_lanes=512):
    """Pick (images per block nb, 128-aligned packed lane width L)."""
    nb_max = max(1, min(N, -(-target_lanes // Wp)))
    best = None
    for nb in range(1, nb_max + 1):
        L = _round_up(nb * Wp, 128)
        n_blocks = -(-N // nb)
        eff = (N * Wp) / (n_blocks * L)      # useful lanes / computed lanes
        # Prefer >=2 grid steps (v7x megacore), then lane efficiency (dense
        # unmasked stores), then wider blocks (amortize per-step overhead).
        score = (1 if n_blocks >= 2 else 0, eff, nb)
        if best is None or score > best[0]:
            best = (score, nb, L)
    return best[1], best[2]


def _randconv_kernel(w_ref, b_ref, rng_ref, x_ref, o_ref, *,
                     C_in, C_out, K, H_pad, L, clamp_output):
    """One lane-packed batch block per grid step.

    w_ref  : SMEM (C_out*C_in*K*K,) f32  conv weights (OIHW, alpha/mixing folded)
    b_ref  : SMEM (C_out,)          f32  bias (alpha folded; zeros if disabled)
    rng_ref: SMEM (2*C_out,)        f32  [range_low | range_up] per channel
    x_ref  : VMEM (1, C_in, H_pad + K - 1, L)  lane-packed padded input block
    o_ref  : VMEM (1, C_out, H_pad, L)         lane-packed output block
    """
    TH = _ROW_TILE
    n_rt = H_pad // TH

    def row_tile(t, carry):
        r0 = pl.multiple_of(t * TH, TH)
        # Per-tile accumulators live in vregs; seeded with the bias so there is
        # no epilogue add.
        acc = [jnp.full((TH, L), b_ref[co], jnp.float32) for co in range(C_out)]
        for ci in range(C_in):
            for ky in range(K):
                slab = x_ref[0, ci, pl.ds(r0 + ky, TH), :].astype(jnp.float32)
                # kx-shifted views via XLU lane rotation; materialized once and
                # reused across all output channels.  shift = L - kx is a left
                # shift by kx (np.roll semantics), so shifted[kx][:, j] is the
                # padded input column j + kx.
                shifted = [slab]
                for kx in range(1, K):
                    shifted.append(pltpu.roll(slab, shift=L - kx, axis=1))
                for kx in range(K):
                    patch = shifted[kx]
                    for co in range(C_out):
                        w = w_ref[((co * C_in + ci) * K + ky) * K + kx]
                        acc[co] = acc[co] + w * patch
        for co in range(C_out):
            a = acc[co]
            if clamp_output:
                a = jnp.maximum(jnp.minimum(a, rng_ref[C_out + co]),
                                rng_ref[co])
            o_ref[0, co, pl.ds(r0, TH), :] = a.astype(o_ref.dtype)
        return carry

    lax.fori_loop(0, n_rt, row_tile, 0)


def randconv_forward(x, weight, bias, range_low, range_up, alpha, *,
                     mixing=True, clamp_output=True, rand_bias=True,
                     target_lanes=512):
    """Pallas implementation of RandConvModule.forward (conv path)."""
    N, C_in, H, W = x.shape
    C_out = weight.shape[0]
    K = weight.shape[2]
    assert K % 2 == 1, "padding=K//2 'same' semantics require an odd kernel size"
    assert weight.shape == (C_out, C_in, K, K)
    if mixing:
        assert C_in == C_out, "mixing mode requires in_channels == out_channels"
    pad = K // 2
    Wp = W + 2 * pad

    # ---- runtime alpha / mixing folding (no recompile when alpha changes):
    #   alpha*conv(x; w, b) + (1-alpha)*x == conv(x; alpha*w + (1-alpha)*Id, alpha*b)
    w_eff = weight.astype(jnp.float32)
    if bias is None or not rand_bias:
        b_eff = jnp.zeros((C_out,), jnp.float32)
    else:
        b_eff = bias.astype(jnp.float32)
    if mixing:
        alpha = jnp.asarray(alpha, jnp.float32)
        w_eff = w_eff * alpha
        b_eff = b_eff * alpha
        ch = jnp.arange(C_out)
        w_eff = w_eff.at[ch, ch, pad, pad].add(1.0 - alpha)

    if clamp_output:
        rng = jnp.concatenate(
            [jnp.ravel(range_low), jnp.ravel(range_up)]).astype(jnp.float32)
    else:
        rng = jnp.zeros((2 * C_out,), jnp.float32)

    # ---- lane packing: nb padded images side by side, width rounded to 128.
    nb, L = _choose_packing(N, Wp, target_lanes)
    NB = -(-N // nb)
    TH = _ROW_TILE
    H_pad = _round_up(H, TH)
    Hp_in = H_pad + 2 * pad

    if nb == 1:
        # W already lane-sized: plain pad, no pack transpose (saves an HBM
        # round trip of the whole tensor).
        xw = jnp.pad(x, ((0, NB * nb - N), (0, 0),
                         (pad, H_pad - H + pad),
                         (pad, L - W - pad)))
    else:
        xp = jnp.pad(x, ((0, NB * nb - N), (0, 0),
                         (pad, H_pad - H + pad),
                         (pad, pad)))
        xw = xp.reshape(NB, nb, C_in, Hp_in, Wp).transpose(0, 2, 3, 1, 4)
        xw = xw.reshape(NB, C_in, Hp_in, nb * Wp)
        if L > nb * Wp:
            xw = jnp.pad(xw, ((0, 0), (0, 0), (0, 0), (0, L - nb * Wp)))

    kernel = functools.partial(
        _randconv_kernel, C_in=C_in, C_out=C_out, K=K, H_pad=H_pad, L=L,
        clamp_output=clamp_output)

    out_wide = pl.pallas_call(
        kernel,
        out_shape=jax.ShapeDtypeStruct((NB, C_out, H_pad, L), jnp.float32),
        grid=(NB,),
        in_specs=[
            pl.BlockSpec(memory_space=pltpu.MemorySpace.SMEM),   # weights
            pl.BlockSpec(memory_space=pltpu.MemorySpace.SMEM),   # bias
            pl.BlockSpec(memory_space=pltpu.MemorySpace.SMEM),   # clamp ranges
            pl.BlockSpec((1, C_in, Hp_in, L), lambda b: (b, 0, 0, 0)),
        ],
        out_specs=pl.BlockSpec((1, C_out, H_pad, L), lambda b: (b, 0, 0, 0)),
        compiler_params=pltpu.CompilerParams(
            dimension_semantics=("parallel",)),
    )(w_eff.reshape(-1), b_eff, rng, xw)

    # ---- unpack / crop ----
    if nb == 1:
        return out_wide[:N, :, :H, :W]
    out = out_wide[:, :, :H, :nb * Wp].reshape(NB, C_out, H, nb, Wp)
    out = out.transpose(0, 3, 1, 2, 4).reshape(NB * nb, C_out, H, Wp)
    return out[:N, :, :, :W]


if __name__ == "__main__":
    # Module config: kernel_size=3, in_channels=3, mixing=True (=> out=in),
    # rand_bias=True, clamp_output=True, identity_prob=0.0.
    N, C, H, W, K = 4, 3, 16, 16, 3
    fan_in = C * K * K
    std = 1.0 / math.sqrt(fan_in)      # kaiming_normal, gain('conv2d') == 1
    bound = 1.0 / math.sqrt(fan_in)    # bias: uniform(-1/sqrt(fan_in), +...)

    key = jax.random.PRNGKey(0)
    kw, kb, kx = jax.random.split(key, 3)
    weight = jax.random.normal(kw, (C, C, K, K), jnp.float32) * std
    bias = jax.random.uniform(kb, (C,), jnp.float32, -bound, bound)
    x = jax.random.normal(kx, (N, C, H, W), jnp.float32)

    data_mean = jnp.array([0.485, 0.456, 0.406], jnp.float32)
    data_std = jnp.array([0.229, 0.224, 0.225], jnp.float32)
    range_up = (1.0 - data_mean) / data_std     # (3,) per-channel
    range_low = (0.0 - data_mean) / data_std
    alpha = jnp.float32(0.7)   # runtime stand-in for module-level random.random()

    fwd = jax.jit(functools.partial(
        randconv_forward, mixing=True, clamp_output=True, rand_bias=True))
    out = jax.block_until_ready(fwd(x, weight, bias, range_low, range_up, alpha))

    # Pure-JAX reference for sanity.
    ref = jax.lax.conv_general_dilated(
        x, weight, window_strides=(1, 1), padding="SAME",
        dimension_numbers=("NCHW", "OIHW", "NCHW")) + bias.reshape(1, C, 1, 1)
    ref = alpha * ref + (1.0 - alpha) * x
    ref = jnp.maximum(jnp.minimum(ref, range_up.reshape(1, C, 1, 1)),
                      range_low.reshape(1, C, 1, 1))

    assert out.shape == (N, C, H, W) and out.dtype == jnp.float32
    err = float(jnp.max(jnp.abs(out - ref)))
    assert err < 1e-4, f"max abs err {err}"
    print("KERNEL_OK")
</pallas_src>

<mosaic_0001>
module attributes {stable_mosaic.version = 11 : i64} {
  func.func @_randconv_kernel(%arg0: i32, %arg1: memref<81xf32, #tpu.memory_space<smem>>, %arg2: memref<3xf32, #tpu.memory_space<smem>>, %arg3: memref<6xf32, #tpu.memory_space<smem>>, %arg4: memref<1x3x18x128xf32, #tpu.memory_space<vmem>>, %arg5: memref<1x3x16x128xf32, #tpu.memory_space<vmem>>) attributes {dimension_semantics = [#tpu.dimension_semantics<parallel>], iteration_bounds = array<i64: 2>, scalar_prefetch = 0 : i64, scratch_operands = 0 : i64, tpu.core_type = #tpu.core_type<tc>, window_params = [{transform_indices = @transform_0, window_bounds = array<i64: 81>}, {transform_indices = @transform_1, window_bounds = array<i64: 3>}, {transform_indices = @transform_2, window_bounds = array<i64: 6>}, {transform_indices = @transform_3, window_bounds = array<i64: 1, 3, 18, 128>}, {transform_indices = @transform_4, window_bounds = array<i64: 1, 3, 16, 128>}]} {
    %c0_i32 = arith.constant 0 : i32
    %c2_i32 = arith.constant 2 : i32
    %0 = arith.addi %c0_i32, %c2_i32 : i32
    %c1_i32 = arith.constant 1 : i32
    scf.for %arg6 = %c0_i32 to %0 step %c1_i32  : i32 {
      %c8_i32 = arith.constant 8 : i32
      %1 = arith.muli %arg6, %c8_i32 : i32
      %2 = tpu.assume_multiple %1, 8 : i32
      %c0 = arith.constant 0 : index
      %3 = memref.load %arg2[%c0] : memref<3xf32, #tpu.memory_space<smem>>
      %4 = vector.broadcast %3 : f32 to vector<8x128xf32>
      %c1 = arith.constant 1 : index
      %5 = memref.load %arg2[%c1] : memref<3xf32, #tpu.memory_space<smem>>
      %6 = vector.broadcast %5 : f32 to vector<8x128xf32>
      %c2 = arith.constant 2 : index
      %7 = memref.load %arg2[%c2] : memref<3xf32, #tpu.memory_space<smem>>
      %8 = vector.broadcast %7 : f32 to vector<8x128xf32>
      %c0_i32_1 = arith.constant 0 : i32
      %9 = arith.addi %2, %c0_i32_1 : i32
      %c0_2 = arith.constant 0 : index
      %c0_3 = arith.constant 0 : index
      %10 = arith.index_cast %9 : i32 to index
      %c0_4 = arith.constant 0 : index
      %11 = vector.load %arg4[%c0_2, %c0_3, %10, %c0_4] : memref<1x3x18x128xf32, #tpu.memory_space<vmem>>, vector<1x1x8x128xf32>
      %12 = vector.shape_cast %11 : vector<1x1x8x128xf32> to vector<8x128xf32>
      %c127_i32 = arith.constant 127 : i32
      %13 = tpu.dynamic_rotate %12 by %c127_i32 dim 1 : vector<8x128xf32>, i32 -> vector<8x128xf32>
      %c126_i32 = arith.constant 126 : i32
      %14 = tpu.dynamic_rotate %12 by %c126_i32 dim 1 : vector<8x128xf32>, i32 -> vector<8x128xf32>
      %c0_5 = arith.constant 0 : index
      %15 = memref.load %arg1[%c0_5] : memref<81xf32, #tpu.memory_space<smem>>
      %16 = vector.broadcast %15 : f32 to vector<8x128xf32>
      %17 = arith.mulf %16, %12 : vector<8x128xf32>
      %18 = arith.addf %4, %17 : vector<8x128xf32>
      %c27 = arith.constant 27 : index
      %19 = memref.load %arg1[%c27] : memref<81xf32, #tpu.memory_space<smem>>
      %20 = vector.broadcast %19 : f32 to vector<8x128xf32>
      %21 = arith.mulf %20, %12 : vector<8x128xf32>
      %22 = arith.addf %6, %21 : vector<8x128xf32>
      %c54 = arith.constant 54 : index
      %23 = memref.load %arg1[%c54] : memref<81xf32, #tpu.memory_space<smem>>
      %24 = vector.broadcast %23 : f32 to vector<8x128xf32>
      %25 = arith.mulf %24, %12 : vector<8x128xf32>
      %26 = arith.addf %8, %25 : vector<8x128xf32>
      %c1_6 = arith.constant 1 : index
      %27 = memref.load %arg1[%c1_6] : memref<81xf32, #tpu.memory_space<smem>>
      %28 = vector.broadcast %27 : f32 to vector<8x128xf32>
      %29 = arith.mulf %28, %13 : vector<8x128xf32>
      %30 = arith.addf %18, %29 : vector<8x128xf32>
      %c28 = arith.constant 28 : index
      %31 = memref.load %arg1[%c28] : memref<81xf32, #tpu.memory_space<smem>>
      %32 = vector.broadcast %31 : f32 to vector<8x128xf32>
      %33 = arith.mulf %32, %13 : vector<8x128xf32>
      %34 = arith.addf %22, %33 : vector<8x128xf32>
      %c55 = arith.constant 55 : index
      %35 = memref.load %arg1[%c55] : memref<81xf32, #tpu.memory_space<smem>>
      %36 = vector.broadcast %35 : f32 to vector<8x128xf32>
      %37 = arith.mulf %36, %13 : vector<8x128xf32>
      %38 = arith.addf %26, %37 : vector<8x128xf32>
      %c2_7 = arith.constant 2 : index
      %39 = memref.load %arg1[%c2_7] : memref<81xf32, #tpu.memory_space<smem>>
      %40 = vector.broadcast %39 : f32 to vector<8x128xf32>
      %41 = arith.mulf %40, %14 : vector<8x128xf32>
      %42 = arith.addf %30, %41 : vector<8x128xf32>
      %c29 = arith.constant 29 : index
      %43 = memref.load %arg1[%c29] : memref<81xf32, #tpu.memory_space<smem>>
      %44 = vector.broadcast %43 : f32 to vector<8x128xf32>
      %45 = arith.mulf %44, %14 : vector<8x128xf32>
      %46 = arith.addf %34, %45 : vector<8x128xf32>
      %c56 = arith.constant 56 : index
      %47 = memref.load %arg1[%c56] : memref<81xf32, #tpu.memory_space<smem>>
      %48 = vector.broadcast %47 : f32 to vector<8x128xf32>
      %49 = arith.mulf %48, %14 : vector<8x128xf32>
      %50 = arith.addf %38, %49 : vector<8x128xf32>
      %c1_i32_8 = arith.constant 1 : i32
      %51 = arith.addi %2, %c1_i32_8 : i32
      %c0_9 = arith.constant 0 : index
      %c0_10 = arith.constant 0 : index
      %52 = arith.index_cast %51 : i32 to index
      %c0_11 = arith.constant 0 : index
      %53 = vector.load %arg4[%c0_9, %c0_10, %52, %c0_11] : memref<1x3x18x128xf32, #tpu.memory_space<vmem>>, vector<1x1x8x128xf32>
      %54 = vector.shape_cast %53 : vector<1x1x8x128xf32> to vector<8x128xf32>
      %c127_i32_12 = arith.constant 127 : i32
      %55 = tpu.dynamic_rotate %54 by %c127_i32_12 dim 1 : vector<8x128xf32>, i32 -> vector<8x128xf32>
      %c126_i32_13 = arith.constant 126 : i32
      %56 = tpu.dynamic_rotate %54 by %c126_i32_13 dim 1 : vector<8x128xf32>, i32 -> vector<8x128xf32>
      %c3 = arith.constant 3 : index
      %57 = memref.load %arg1[%c3] : memref<81xf32, #tpu.memory_space<smem>>
      %58 = vector.broadcast %57 : f32 to vector<8x128xf32>
      %59 = arith.mulf %58, %54 : vector<8x128xf32>
      %60 = arith.addf %42, %59 : vector<8x128xf32>
      %c30 = arith.constant 30 : index
      %61 = memref.load %arg1[%c30] : memref<81xf32, #tpu.memory_space<smem>>
      %62 = vector.broadcast %61 : f32 to vector<8x128xf32>
      %63 = arith.mulf %62, %54 : vector<8x128xf32>
      %64 = arith.addf %46, %63 : vector<8x128xf32>
      %c57 = arith.constant 57 : index
      %65 = memref.load %arg1[%c57] : memref<81xf32, #tpu.memory_space<smem>>
      %66 = vector.broadcast %65 : f32 to vector<8x128xf32>
      %67 = arith.mulf %66, %54 : vector<8x128xf32>
      %68 = arith.addf %50, %67 : vector<8x128xf32>
      %c4 = arith.constant 4 : index
      %69 = memref.load %arg1[%c4] : memref<81xf32, #tpu.memory_space<smem>>
      %70 = vector.broadcast %69 : f32 to vector<8x128xf32>
      %71 = arith.mulf %70, %55 : vector<8x128xf32>
      %72 = arith.addf %60, %71 : vector<8x128xf32>
      %c31 = arith.constant 31 : index
      %73 = memref.load %arg1[%c31] : memref<81xf32, #tpu.memory_space<smem>>
      %74 = vector.broadcast %73 : f32 to vector<8x128xf32>
      %75 = arith.mulf %74, %55 : vector<8x128xf32>
      %76 = arith.addf %64, %75 : vector<8x128xf32>
      %c58 = arith.constant 58 : index
      %77 = memref.load %arg1[%c58] : memref<81xf32, #tpu.memory_space<smem>>
      %78 = vector.broadcast %77 : f32 to vector<8x128xf32>
      %79 = arith.mulf %78, %55 : vector<8x128xf32>
      %80 = arith.addf %68, %79 : vector<8x128xf32>
      %c5 = arith.constant 5 : index
      %81 = memref.load %arg1[%c5] : memref<81xf32, #tpu.memory_space<smem>>
      %82 = vector.broadcast %81 : f32 to vector<8x128xf32>
      %83 = arith.mulf %82, %56 : vector<8x128xf32>
      %84 = arith.addf %72, %83 : vector<8x128xf32>
      %c32 = arith.constant 32 : index
      %85 = memref.load %arg1[%c32] : memref<81xf32, #tpu.memory_space<smem>>
      %86 = vector.broadcast %85 : f32 to vector<8x128xf32>
      %87 = arith.mulf %86, %56 : vector<8x128xf32>
      %88 = arith.addf %76, %87 : vector<8x128xf32>
      %c59 = arith.constant 59 : index
      %89 = memref.load %arg1[%c59] : memref<81xf32, #tpu.memory_space<smem>>
      %90 = vector.broadcast %89 : f32 to vector<8x128xf32>
      %91 = arith.mulf %90, %56 : vector<8x128xf32>
      %92 = arith.addf %80, %91 : vector<8x128xf32>
      %c2_i32_14 = arith.constant 2 : i32
      %93 = arith.addi %2, %c2_i32_14 : i32
      %c0_15 = arith.constant 0 : index
      %c0_16 = arith.constant 0 : index
      %94 = arith.index_cast %93 : i32 to index
      %c0_17 = arith.constant 0 : index
      %95 = vector.load %arg4[%c0_15, %c0_16, %94, %c0_17] : memref<1x3x18x128xf32, #tpu.memory_space<vmem>>, vector<1x1x8x128xf32>
      %96 = vector.shape_cast %95 : vector<1x1x8x128xf32> to vector<8x128xf32>
      %c127_i32_18 = arith.constant 127 : i32
      %97 = tpu.dynamic_rotate %96 by %c127_i32_18 dim 1 : vector<8x128xf32>, i32 -> vector<8x128xf32>
      %c126_i32_19 = arith.constant 126 : i32
      %98 = tpu.dynamic_rotate %96 by %c126_i32_19 dim 1 : vector<8x128xf32>, i32 -> vector<8x128xf32>
      %c6 = arith.constant 6 : index
      %99 = memref.load %arg1[%c6] : memref<81xf32, #tpu.memory_space<smem>>
      %100 = vector.broadcast %99 : f32 to vector<8x128xf32>
      %101 = arith.mulf %100, %96 : vector<8x128xf32>
      %102 = arith.addf %84, %101 : vector<8x128xf32>
      %c33 = arith.constant 33 : index
      %103 = memref.load %arg1[%c33] : memref<81xf32, #tpu.memory_space<smem>>
      %104 = vector.broadcast %103 : f32 to vector<8x128xf32>
      %105 = arith.mulf %104, %96 : vector<8x128xf32>
      %106 = arith.addf %88, %105 : vector<8x128xf32>
      %c60 = arith.constant 60 : index
      %107 = memref.load %arg1[%c60] : memref<81xf32, #tpu.memory_space<smem>>
      %108 = vector.broadcast %107 : f32 to vector<8x128xf32>
      %109 = arith.mulf %108, %96 : vector<8x128xf32>
      %110 = arith.addf %92, %109 : vector<8x128xf32>
      %c7 = arith.constant 7 : index
      %111 = memref.load %arg1[%c7] : memref<81xf32, #tpu.memory_space<smem>>
      %112 = vector.broadcast %111 : f32 to vector<8x128xf32>
      %113 = arith.mulf %112, %97 : vector<8x128xf32>
      %114 = arith.addf %102, %113 : vector<8x128xf32>
      %c34 = arith.constant 34 : index
      %115 = memref.load %arg1[%c34] : memref<81xf32, #tpu.memory_space<smem>>
      %116 = vector.broadcast %115 : f32 to vector<8x128xf32>
      %117 = arith.mulf %116, %97 : vector<8x128xf32>
      %118 = arith.addf %106, %117 : vector<8x128xf32>
      %c61 = arith.constant 61 : index
      %119 = memref.load %arg1[%c61] : memref<81xf32, #tpu.memory_space<smem>>
      %120 = vector.broadcast %119 : f32 to vector<8x128xf32>
      %121 = arith.mulf %120, %97 : vector<8x128xf32>
      %122 = arith.addf %110, %121 : vector<8x128xf32>
      %c8 = arith.constant 8 : index
      %123 = memref.load %arg1[%c8] : memref<81xf32, #tpu.memory_space<smem>>
      %124 = vector.broadcast %123 : f32 to vector<8x128xf32>
      %125 = arith.mulf %124, %98 : vector<8x128xf32>
      %126 = arith.addf %114, %125 : vector<8x128xf32>
      %c35 = arith.constant 35 : index
      %127 = memref.load %arg1[%c35] : memref<81xf32, #tpu.memory_space<smem>>
      %128 = vector.broadcast %127 : f32 to vector<8x128xf32>
      %129 = arith.mulf %128, %98 : vector<8x128xf32>
      %130 = arith.addf %118, %129 : vector<8x128xf32>
      %c62 = arith.constant 62 : index
      %131 = memref.load %arg1[%c62] : memref<81xf32, #tpu.memory_space<smem>>
      %132 = vector.broadcast %131 : f32 to vector<8x128xf32>
      %133 = arith.mulf %132, %98 : vector<8x128xf32>
      %134 = arith.addf %122, %133 : vector<8x128xf32>
      %c0_i32_20 = arith.constant 0 : i32
      %135 = arith.addi %2, %c0_i32_20 : i32
      %c0_21 = arith.constant 0 : index
      %c1_22 = arith.constant 1 : index
      %136 = arith.index_cast %135 : i32 to index
      %c0_23 = arith.constant 0 : index
      %137 = vector.load %arg4[%c0_21, %c1_22, %136, %c0_23] : memref<1x3x18x128xf32, #tpu.memory_space<vmem>>, vector<1x1x8x128xf32>
      %138 = vector.shape_cast %137 : vector<1x1x8x128xf32> to vector<8x128xf32>
      %c127_i32_24 = arith.constant 127 : i32
      %139 = tpu.dynamic_rotate %138 by %c127_i32_24 dim 1 : vector<8x128xf32>, i32 -> vector<8x128xf32>
      %c126_i32_25 = arith.constant 126 : i32
      %140 = tpu.dynamic_rotate %138 by %c126_i32_25 dim 1 : vector<8x128xf32>, i32 -> vector<8x128xf32>
      %c9 = arith.constant 9 : index
      %141 = memref.load %arg1[%c9] : memref<81xf32, #tpu.memory_space<smem>>
      %142 = vector.broadcast %141 : f32 to vector<8x128xf32>
      %143 = arith.mulf %142, %138 : vector<8x128xf32>
      %144 = arith.addf %126, %143 : vector<8x128xf32>
      %c36 = arith.constant 36 : index
      %145 = memref.load %arg1[%c36] : memref<81xf32, #tpu.memory_space<smem>>
      %146 = vector.broadcast %145 : f32 to vector<8x128xf32>
      %147 = arith.mulf %146, %138 : vector<8x128xf32>
      %148 = arith.addf %130, %147 : vector<8x128xf32>
      %c63 = arith.constant 63 : index
      %149 = memref.load %arg1[%c63] : memref<81xf32, #tpu.memory_space<smem>>
      %150 = vector.broadcast %149 : f32 to vector<8x128xf32>
      %151 = arith.mulf %150, %138 : vector<8x128xf32>
      %152 = arith.addf %134, %151 : vector<8x128xf32>
      %c10 = arith.constant 10 : index
      %153 = memref.load %arg1[%c10] : memref<81xf32, #tpu.memory_space<smem>>
      %154 = vector.broadcast %153 : f32 to vector<8x128xf32>
      %155 = arith.mulf %154, %139 : vector<8x128xf32>
      %156 = arith.addf %144, %155 : vector<8x128xf32>
      %c37 = arith.constant 37 : index
      %157 = memref.load %arg1[%c37] : memref<81xf32, #tpu.memory_space<smem>>
      %158 = vector.broadcast %157 : f32 to vector<8x128xf32>
      %159 = arith.mulf %158, %139 : vector<8x128xf32>
      %160 = arith.addf %148, %159 : vector<8x128xf32>
      %c64 = arith.constant 64 : index
      %161 = memref.load %arg1[%c64] : memref<81xf32, #tpu.memory_space<smem>>
      %162 = vector.broadcast %161 : f32 to vector<8x128xf32>
      %163 = arith.mulf %162, %139 : vector<8x128xf32>
      %164 = arith.addf %152, %163 : vector<8x128xf32>
      %c11 = arith.constant 11 : index
      %165 = memref.load %arg1[%c11] : memref<81xf32, #tpu.memory_space<smem>>
      %166 = vector.broadcast %165 : f32 to vector<8x128xf32>
      %167 = arith.mulf %166, %140 : vector<8x128xf32>
      %168 = arith.addf %156, %167 : vector<8x128xf32>
      %c38 = arith.constant 38 : index
      %169 = memref.load %arg1[%c38] : memref<81xf32, #tpu.memory_space<smem>>
      %170 = vector.broadcast %169 : f32 to vector<8x128xf32>
      %171 = arith.mulf %170, %140 : vector<8x128xf32>
      %172 = arith.addf %160, %171 : vector<8x128xf32>
      %c65 = arith.constant 65 : index
      %173 = memref.load %arg1[%c65] : memref<81xf32, #tpu.memory_space<smem>>
      %174 = vector.broadcast %173 : f32 to vector<8x128xf32>
      %175 = arith.mulf %174, %140 : vector<8x128xf32>
      %176 = arith.addf %164, %175 : vector<8x128xf32>
      %c1_i32_26 = arith.constant 1 : i32
      %177 = arith.addi %2, %c1_i32_26 : i32
      %c0_27 = arith.constant 0 : index
      %c1_28 = arith.constant 1 : index
      %178 = arith.index_cast %177 : i32 to index
      %c0_29 = arith.constant 0 : index
      %179 = vector.load %arg4[%c0_27, %c1_28, %178, %c0_29] : memref<1x3x18x128xf32, #tpu.memory_space<vmem>>, vector<1x1x8x128xf32>
      %180 = vector.shape_cast %179 : vector<1x1x8x128xf32> to vector<8x128xf32>
      %c127_i32_30 = arith.constant 127 : i32
      %181 = tpu.dynamic_rotate %180 by %c127_i32_30 dim 1 : vector<8x128xf32>, i32 -> vector<8x128xf32>
      %c126_i32_31 = arith.constant 126 : i32
      %182 = tpu.dynamic_rotate %180 by %c126_i32_31 dim 1 : vector<8x128xf32>, i32 -> vector<8x128xf32>
      %c12 = arith.constant 12 : index
      %183 = memref.load %arg1[%c12] : memref<81xf32, #tpu.memory_space<smem>>
      %184 = vector.broadcast %183 : f32 to vector<8x128xf32>
      %185 = arith.mulf %184, %180 : vector<8x128xf32>
      %186 = arith.addf %168, %185 : vector<8x128xf32>
      %c39 = arith.constant 39 : index
      %187 = memref.load %arg1[%c39] : memref<81xf32, #tpu.memory_space<smem>>
      %188 = vector.broadcast %187 : f32 to vector<8x128xf32>
      %189 = arith.mulf %188, %180 : vector<8x128xf32>
      %190 = arith.addf %172, %189 : vector<8x128xf32>
      %c66 = arith.constant 66 : index
      %191 = memref.load %arg1[%c66] : memref<81xf32, #tpu.memory_space<smem>>
      %192 = vector.broadcast %191 : f32 to vector<8x128xf32>
      %193 = arith.mulf %192, %180 : vector<8x128xf32>
      %194 = arith.addf %176, %193 : vector<8x128xf32>
      %c13 = arith.constant 13 : index
      %195 = memref.load %arg1[%c13] : memref<81xf32, #tpu.memory_space<smem>>
      %196 = vector.broadcast %195 : f32 to vector<8x128xf32>
      %197 = arith.mulf %196, %181 : vector<8x128xf32>
      %198 = arith.addf %186, %197 : vector<8x128xf32>
      %c40 = arith.constant 40 : index
      %199 = memref.load %arg1[%c40] : memref<81xf32, #tpu.memory_space<smem>>
      %200 = vector.broadcast %199 : f32 to vector<8x128xf32>
      %201 = arith.mulf %200, %181 : vector<8x128xf32>
      %202 = arith.addf %190, %201 : vector<8x128xf32>
      %c67 = arith.constant 67 : index
      %203 = memref.load %arg1[%c67] : memref<81xf32, #tpu.memory_space<smem>>
      %204 = vector.broadcast %203 : f32 to vector<8x128xf32>
      %205 = arith.mulf %204, %181 : vector<8x128xf32>
      %206 = arith.addf %194, %205 : vector<8x128xf32>
      %c14 = arith.constant 14 : index
      %207 = memref.load %arg1[%c14] : memref<81xf32, #tpu.memory_space<smem>>
      %208 = vector.broadcast %207 : f32 to vector<8x128xf32>
      %209 = arith.mulf %208, %182 : vector<8x128xf32>
      %210 = arith.addf %198, %209 : vector<8x128xf32>
      %c41 = arith.constant 41 : index
      %211 = memref.load %arg1[%c41] : memref<81xf32, #tpu.memory_space<smem>>
      %212 = vector.broadcast %211 : f32 to vector<8x128xf32>
      %213 = arith.mulf %212, %182 : vector<8x128xf32>
      %214 = arith.addf %202, %213 : vector<8x128xf32>
      %c68 = arith.constant 68 : index
      %215 = memref.load %arg1[%c68] : memref<81xf32, #tpu.memory_space<smem>>
      %216 = vector.broadcast %215 : f32 to vector<8x128xf32>
      %217 = arith.mulf %216, %182 : vector<8x128xf32>
      %218 = arith.addf %206, %217 : vector<8x128xf32>
      %c2_i32_32 = arith.constant 2 : i32
      %219 = arith.addi %2, %c2_i32_32 : i32
      %c0_33 = arith.constant 0 : index
      %c1_34 = arith.constant 1 : index
      %220 = arith.index_cast %219 : i32 to index
      %c0_35 = arith.constant 0 : index
      %221 = vector.load %arg4[%c0_33, %c1_34, %220, %c0_35] : memref<1x3x18x128xf32, #tpu.memory_space<vmem>>, vector<1x1x8x128xf32>
      %222 = vector.shape_cast %221 : vector<1x1x8x128xf32> to vector<8x128xf32>
      %c127_i32_36 = arith.constant 127 : i32
      %223 = tpu.dynamic_rotate %222 by %c127_i32_36 dim 1 : vector<8x128xf32>, i32 -> vector<8x128xf32>
      %c126_i32_37 = arith.constant 126 : i32
      %224 = tpu.dynamic_rotate %222 by %c126_i32_37 dim 1 : vector<8x128xf32>, i32 -> vector<8x128xf32>
      %c15 = arith.constant 15 : index
      %225 = memref.load %arg1[%c15] : memref<81xf32, #tpu.memory_space<smem>>
      %226 = vector.broadcast %225 : f32 to vector<8x128xf32>
      %227 = arith.mulf %226, %222 : vector<8x128xf32>
      %228 = arith.addf %210, %227 : vector<8x128xf32>
      %c42 = arith.constant 42 : index
      %229 = memref.load %arg1[%c42] : memref<81xf32, #tpu.memory_space<smem>>
      %230 = vector.broadcast %229 : f32 to vector<8x128xf32>
      %231 = arith.mulf %230, %222 : vector<8x128xf32>
      %232 = arith.addf %214, %231 : vector<8x128xf32>
      %c69 = arith.constant 69 : index
      %233 = memref.load %arg1[%c69] : memref<81xf32, #tpu.memory_space<smem>>
      %234 = vector.broadcast %233 : f32 to vector<8x128xf32>
      %235 = arith.mulf %234, %222 : vector<8x128xf32>
      %236 = arith.addf %218, %235 : vector<8x128xf32>
      %c16 = arith.constant 16 : index
      %237 = memref.load %arg1[%c16] : memref<81xf32, #tpu.memory_space<smem>>
      %238 = vector.broadcast %237 : f32 to vector<8x128xf32>
      %239 = arith.mulf %238, %223 : vector<8x128xf32>
      %240 = arith.addf %228, %239 : vector<8x128xf32>
      %c43 = arith.constant 43 : index
      %241 = memref.load %arg1[%c43] : memref<81xf32, #tpu.memory_space<smem>>
      %242 = vector.broadcast %241 : f32 to vector<8x128xf32>
      %243 = arith.mulf %242, %223 : vector<8x128xf32>
      %244 = arith.addf %232, %243 : vector<8x128xf32>
      %c70 = arith.constant 70 : index
      %245 = memref.load %arg1[%c70] : memref<81xf32, #tpu.memory_space<smem>>
      %246 = vector.broadcast %245 : f32 to vector<8x128xf32>
      %247 = arith.mulf %246, %223 : vector<8x128xf32>
      %248 = arith.addf %236, %247 : vector<8x128xf32>
      %c17 = arith.constant 17 : index
      %249 = memref.load %arg1[%c17] : memref<81xf32, #tpu.memory_space<smem>>
      %250 = vector.broadcast %249 : f32 to vector<8x128xf32>
      %251 = arith.mulf %250, %224 : vector<8x128xf32>
      %252 = arith.addf %240, %251 : vector<8x128xf32>
      %c44 = arith.constant 44 : index
      %253 = memref.load %arg1[%c44] : memref<81xf32, #tpu.memory_space<smem>>
      %254 = vector.broadcast %253 : f32 to vector<8x128xf32>
      %255 = arith.mulf %254, %224 : vector<8x128xf32>
      %256 = arith.addf %244, %255 : vector<8x128xf32>
      %c71 = arith.constant 71 : index
      %257 = memref.load %arg1[%c71] : memref<81xf32, #tpu.memory_space<smem>>
      %258 = vector.broadcast %257 : f32 to vector<8x128xf32>
      %259 = arith.mulf %258, %224 : vector<8x128xf32>
      %260 = arith.addf %248, %259 : vector<8x128xf32>
      %c0_i32_38 = arith.constant 0 : i32
      %261 = arith.addi %2, %c0_i32_38 : i32
      %c0_39 = arith.constant 0 : index
      %c2_40 = arith.constant 2 : index
      %262 = arith.index_cast %261 : i32 to index
      %c0_41 = arith.constant 0 : index
      %263 = vector.load %arg4[%c0_39, %c2_40, %262, %c0_41] : memref<1x3x18x128xf32, #tpu.memory_space<vmem>>, vector<1x1x8x128xf32>
      %264 = vector.shape_cast %263 : vector<1x1x8x128xf32> to vector<8x128xf32>
      %c127_i32_42 = arith.constant 127 : i32
      %265 = tpu.dynamic_rotate %264 by %c127_i32_42 dim 1 : vector<8x128xf32>, i32 -> vector<8x128xf32>
      %c126_i32_43 = arith.constant 126 : i32
      %266 = tpu.dynamic_rotate %264 by %c126_i32_43 dim 1 : vector<8x128xf32>, i32 -> vector<8x128xf32>
      %c18 = arith.constant 18 : index
      %267 = memref.load %arg1[%c18] : memref<81xf32, #tpu.memory_space<smem>>
      %268 = vector.broadcast %267 : f32 to vector<8x128xf32>
      %269 = arith.mulf %268, %264 : vector<8x128xf32>
      %270 = arith.addf %252, %269 : vector<8x128xf32>
      %c45 = arith.constant 45 : index
      %271 = memref.load %arg1[%c45] : memref<81xf32, #tpu.memory_space<smem>>
      %272 = vector.broadcast %271 : f32 to vector<8x128xf32>
      %273 = arith.mulf %272, %264 : vector<8x128xf32>
      %274 = arith.addf %256, %273 : vector<8x128xf32>
      %c72 = arith.constant 72 : index
      %275 = memref.load %arg1[%c72] : memref<81xf32, #tpu.memory_space<smem>>
      %276 = vector.broadcast %275 : f32 to vector<8x128xf32>
      %277 = arith.mulf %276, %264 : vector<8x128xf32>
      %278 = arith.addf %260, %277 : vector<8x128xf32>
      %c19 = arith.constant 19 : index
      %279 = memref.load %arg1[%c19] : memref<81xf32, #tpu.memory_space<smem>>
      %280 = vector.broadcast %279 : f32 to vector<8x128xf32>
      %281 = arith.mulf %280, %265 : vector<8x128xf32>
      %282 = arith.addf %270, %281 : vector<8x128xf32>
      %c46 = arith.constant 46 : index
      %283 = memref.load %arg1[%c46] : memref<81xf32, #tpu.memory_space<smem>>
      %284 = vector.broadcast %283 : f32 to vector<8x128xf32>
      %285 = arith.mulf %284, %265 : vector<8x128xf32>
      %286 = arith.addf %274, %285 : vector<8x128xf32>
      %c73 = arith.constant 73 : index
      %287 = memref.load %arg1[%c73] : memref<81xf32, #tpu.memory_space<smem>>
      %288 = vector.broadcast %287 : f32 to vector<8x128xf32>
      %289 = arith.mulf %288, %265 : vector<8x128xf32>
      %290 = arith.addf %278, %289 : vector<8x128xf32>
      %c20 = arith.constant 20 : index
      %291 = memref.load %arg1[%c20] : memref<81xf32, #tpu.memory_space<smem>>
      %292 = vector.broadcast %291 : f32 to vector<8x128xf32>
      %293 = arith.mulf %292, %266 : vector<8x128xf32>
      %294 = arith.addf %282, %293 : vector<8x128xf32>
      %c47 = arith.constant 47 : index
      %295 = memref.load %arg1[%c47] : memref<81xf32, #tpu.memory_space<smem>>
      %296 = vector.broadcast %295 : f32 to vector<8x128xf32>
      %297 = arith.mulf %296, %266 : vector<8x128xf32>
      %298 = arith.addf %286, %297 : vector<8x128xf32>
      %c74 = arith.constant 74 : index
      %299 = memref.load %arg1[%c74] : memref<81xf32, #tpu.memory_space<smem>>
      %300 = vector.broadcast %299 : f32 to vector<8x128xf32>
      %301 = arith.mulf %300, %266 : vector<8x128xf32>
      %302 = arith.addf %290, %301 : vector<8x128xf32>
      %c1_i32_44 = arith.constant 1 : i32
      %303 = arith.addi %2, %c1_i32_44 : i32
      %c0_45 = arith.constant 0 : index
      %c2_46 = arith.constant 2 : index
      %304 = arith.index_cast %303 : i32 to index
      %c0_47 = arith.constant 0 : index
      %305 = vector.load %arg4[%c0_45, %c2_46, %304, %c0_47] : memref<1x3x18x128xf32, #tpu.memory_space<vmem>>, vector<1x1x8x128xf32>
      %306 = vector.shape_cast %305 : vector<1x1x8x128xf32> to vector<8x128xf32>
      %c127_i32_48 = arith.constant 127 : i32
      %307 = tpu.dynamic_rotate %306 by %c127_i32_48 dim 1 : vector<8x128xf32>, i32 -> vector<8x128xf32>
      %c126_i32_49 = arith.constant 126 : i32
      %308 = tpu.dynamic_rotate %306 by %c126_i32_49 dim 1 : vector<8x128xf32>, i32 -> vector<8x128xf32>
      %c21 = arith.constant 21 : index
      %309 = memref.load %arg1[%c21] : memref<81xf32, #tpu.memory_space<smem>>
      %310 = vector.broadcast %309 : f32 to vector<8x128xf32>
      %311 = arith.mulf %310, %306 : vector<8x128xf32>
      %312 = arith.addf %294, %311 : vector<8x128xf32>
      %c48 = arith.constant 48 : index
      %313 = memref.load %arg1[%c48] : memref<81xf32, #tpu.memory_space<smem>>
      %314 = vector.broadcast %313 : f32 to vector<8x128xf32>
      %315 = arith.mulf %314, %306 : vector<8x128xf32>
      %316 = arith.addf %298, %315 : vector<8x128xf32>
      %c75 = arith.constant 75 : index
      %317 = memref.load %arg1[%c75] : memref<81xf32, #tpu.memory_space<smem>>
      %318 = vector.broadcast %317 : f32 to vector<8x128xf32>
      %319 = arith.mulf %318, %306 : vector<8x128xf32>
      %320 = arith.addf %302, %319 : vector<8x128xf32>
      %c22 = arith.constant 22 : index
      %321 = memref.load %arg1[%c22] : memref<81xf32, #tpu.memory_space<smem>>
      %322 = vector.broadcast %321 : f32 to vector<8x128xf32>
      %323 = arith.mulf %322, %307 : vector<8x128xf32>
      %324 = arith.addf %312, %323 : vector<8x128xf32>
      %c49 = arith.constant 49 : index
      %325 = memref.load %arg1[%c49] : memref<81xf32, #tpu.memory_space<smem>>
      %326 = vector.broadcast %325 : f32 to vector<8x128xf32>
      %327 = arith.mulf %326, %307 : vector<8x128xf32>
      %328 = arith.addf %316, %327 : vector<8x128xf32>
      %c76 = arith.constant 76 : index
      %329 = memref.load %arg1[%c76] : memref<81xf32, #tpu.memory_space<smem>>
      %330 = vector.broadcast %329 : f32 to vector<8x128xf32>
      %331 = arith.mulf %330, %307 : vector<8x128xf32>
      %332 = arith.addf %320, %331 : vector<8x128xf32>
      %c23 = arith.constant 23 : index
      %333 = memref.load %arg1[%c23] : memref<81xf32, #tpu.memory_space<smem>>
      %334 = vector.broadcast %333 : f32 to vector<8x128xf32>
      %335 = arith.mulf %334, %308 : vector<8x128xf32>
      %336 = arith.addf %324, %335 : vector<8x128xf32>
      %c50 = arith.constant 50 : index
      %337 = memref.load %arg1[%c50] : memref<81xf32, #tpu.memory_space<smem>>
      %338 = vector.broadcast %337 : f32 to vector<8x128xf32>
      %339 = arith.mulf %338, %308 : vector<8x128xf32>
      %340 = arith.addf %328, %339 : vector<8x128xf32>
      %c77 = arith.constant 77 : index
      %341 = memref.load %arg1[%c77] : memref<81xf32, #tpu.memory_space<smem>>
      %342 = vector.broadcast %341 : f32 to vector<8x128xf32>
      %343 = arith.mulf %342, %308 : vector<8x128xf32>
      %344 = arith.addf %332, %343 : vector<8x128xf32>
      %c2_i32_50 = arith.constant 2 : i32
      %345 = arith.addi %2, %c2_i32_50 : i32
      %c0_51 = arith.constant 0 : index
      %c2_52 = arith.constant 2 : index
      %346 = arith.index_cast %345 : i32 to index
      %c0_53 = arith.constant 0 : index
      %347 = vector.load %arg4[%c0_51, %c2_52, %346, %c0_53] : memref<1x3x18x128xf32, #tpu.memory_space<vmem>>, vector<1x1x8x128xf32>
      %348 = vector.shape_cast %347 : vector<1x1x8x128xf32> to vector<8x128xf32>
      %c127_i32_54 = arith.constant 127 : i32
      %349 = tpu.dynamic_rotate %348 by %c127_i32_54 dim 1 : vector<8x128xf32>, i32 -> vector<8x128xf32>
      %c126_i32_55 = arith.constant 126 : i32
      %350 = tpu.dynamic_rotate %348 by %c126_i32_55 dim 1 : vector<8x128xf32>, i32 -> vector<8x128xf32>
      %c24 = arith.constant 24 : index
      %351 = memref.load %arg1[%c24] : memref<81xf32, #tpu.memory_space<smem>>
      %352 = vector.broadcast %351 : f32 to vector<8x128xf32>
      %353 = arith.mulf %352, %348 : vector<8x128xf32>
      %354 = arith.addf %336, %353 : vector<8x128xf32>
      %c51 = arith.constant 51 : index
      %355 = memref.load %arg1[%c51] : memref<81xf32, #tpu.memory_space<smem>>
      %356 = vector.broadcast %355 : f32 to vector<8x128xf32>
      %357 = arith.mulf %356, %348 : vector<8x128xf32>
      %358 = arith.addf %340, %357 : vector<8x128xf32>
      %c78 = arith.constant 78 : index
      %359 = memref.load %arg1[%c78] : memref<81xf32, #tpu.memory_space<smem>>
      %360 = vector.broadcast %359 : f32 to vector<8x128xf32>
      %361 = arith.mulf %360, %348 : vector<8x128xf32>
      %362 = arith.addf %344, %361 : vector<8x128xf32>
      %c25 = arith.constant 25 : index
      %363 = memref.load %arg1[%c25] : memref<81xf32, #tpu.memory_space<smem>>
      %364 = vector.broadcast %363 : f32 to vector<8x128xf32>
      %365 = arith.mulf %364, %349 : vector<8x128xf32>
      %366 = arith.addf %354, %365 : vector<8x128xf32>
      %c52 = arith.constant 52 : index
      %367 = memref.load %arg1[%c52] : memref<81xf32, #tpu.memory_space<smem>>
      %368 = vector.broadcast %367 : f32 to vector<8x128xf32>
      %369 = arith.mulf %368, %349 : vector<8x128xf32>
      %370 = arith.addf %358, %369 : vector<8x128xf32>
      %c79 = arith.constant 79 : index
      %371 = memref.load %arg1[%c79] : memref<81xf32, #tpu.memory_space<smem>>
      %372 = vector.broadcast %371 : f32 to vector<8x128xf32>
      %373 = arith.mulf %372, %349 : vector<8x128xf32>
      %374 = arith.addf %362, %373 : vector<8x128xf32>
      %c26 = arith.constant 26 : index
      %375 = memref.load %arg1[%c26] : memref<81xf32, #tpu.memory_space<smem>>
      %376 = vector.broadcast %375 : f32 to vector<8x128xf32>
      %377 = arith.mulf %376, %350 : vector<8x128xf32>
      %378 = arith.addf %366, %377 : vector<8x128xf32>
      %c53 = arith.constant 53 : index
      %379 = memref.load %arg1[%c53] : memref<81xf32, #tpu.memory_space<smem>>
      %380 = vector.broadcast %379 : f32 to vector<8x128xf32>
      %381 = arith.mulf %380, %350 : vector<8x128xf32>
      %382 = arith.addf %370, %381 : vector<8x128xf32>
      %c80 = arith.constant 80 : index
      %383 = memref.load %arg1[%c80] : memref<81xf32, #tpu.memory_space<smem>>
      %384 = vector.broadcast %383 : f32 to vector<8x128xf32>
      %385 = arith.mulf %384, %350 : vector<8x128xf32>
      %386 = arith.addf %374, %385 : vector<8x128xf32>
      %c3_56 = arith.constant 3 : index
      %387 = memref.load %arg3[%c3_56] : memref<6xf32, #tpu.memory_space<smem>>
      %388 = vector.broadcast %387 : f32 to vector<8x128xf32>
      %389 = arith.minimumf %378, %388 : vector<8x128xf32>
      %c0_57 = arith.constant 0 : index
      %390 = memref.load %arg3[%c0_57] : memref<6xf32, #tpu.memory_space<smem>>
      %391 = vector.broadcast %390 : f32 to vector<8x128xf32>
      %392 = arith.maximumf %389, %391 : vector<8x128xf32>
      %c0_58 = arith.constant 0 : index
      %c0_59 = arith.constant 0 : index
      %393 = arith.index_cast %2 : i32 to index
      %c0_60 = arith.constant 0 : index
      %394 = vector.load %arg5[%c0_58, %c0_59, %393, %c0_60] : memref<1x3x16x128xf32, #tpu.memory_space<vmem>>, vector<1x1x8x128xf32>
      %395 = vector.shape_cast %394 : vector<1x1x8x128xf32> to vector<8x128xf32>
      %396 = vector.shape_cast %392 : vector<8x128xf32> to vector<1x1x8x128xf32>
      tpu.vector_store %arg5[%c0_58, %c0_59, %393, %c0_60], %396 {strides = array<i32>} : memref<1x3x16x128xf32, #tpu.memory_space<vmem>>, vector<1x1x8x128xf32>,
      %c4_61 = arith.constant 4 : index
      %397 = memref.load %arg3[%c4_61] : memref<6xf32, #tpu.memory_space<smem>>
      %398 = vector.broadcast %397 : f32 to vector<8x128xf32>
      %399 = arith.minimumf %382, %398 : vector<8x128xf32>
      %c1_62 = arith.constant 1 : index
      %400 = memref.load %arg3[%c1_62] : memref<6xf32, #tpu.memory_space<smem>>
      %401 = vector.broadcast %400 : f32 to vector<8x128xf32>
      %402 = arith.maximumf %399, %401 : vector<8x128xf32>
      %c0_63 = arith.constant 0 : index
      %c1_64 = arith.constant 1 : index
      %403 = arith.index_cast %2 : i32 to index
      %c0_65 = arith.constant 0 : index
      %404 = vector.load %arg5[%c0_63, %c1_64, %403, %c0_65] : memref<1x3x16x128xf32, #tpu.memory_space<vmem>>, vector<1x1x8x128xf32>
      %405 = vector.shape_cast %404 : vector<1x1x8x128xf32> to vector<8x128xf32>
      %406 = vector.shape_cast %402 : vector<8x128xf32> to vector<1x1x8x128xf32>
      tpu.vector_store %arg5[%c0_63, %c1_64, %403, %c0_65], %406 {strides = array<i32>} : memref<1x3x16x128xf32, #tpu.memory_space<vmem>>, vector<1x1x8x128xf32>,
      %c5_66 = arith.constant 5 : index
      %407 = memref.load %arg3[%c5_66] : memref<6xf32, #tpu.memory_space<smem>>
      %408 = vector.broadcast %407 : f32 to vector<8x128xf32>
      %409 = arith.minimumf %386, %408 : vector<8x128xf32>
      %c2_67 = arith.constant 2 : index
      %410 = memref.load %arg3[%c2_67] : memref<6xf32, #tpu.memory_space<smem>>
      %411 = vector.broadcast %410 : f32 to vector<8x128xf32>
      %412 = arith.maximumf %409, %411 : vector<8x128xf32>
      %c0_68 = arith.constant 0 : index
      %c2_69 = arith.constant 2 : index
      %413 = arith.index_cast %2 : i32 to index
      %c0_70 = arith.constant 0 : index
      %414 = vector.load %arg5[%c0_68, %c2_69, %413, %c0_70] : memref<1x3x16x128xf32, #tpu.memory_space<vmem>>, vector<1x1x8x128xf32>
      %415 = vector.shape_cast %414 : vector<1x1x8x128xf32> to vector<8x128xf32>
      %416 = vector.shape_cast %412 : vector<8x128xf32> to vector<1x1x8x128xf32>
      tpu.vector_store %arg5[%c0_68, %c2_69, %413, %c0_70], %416 {strides = array<i32>} : memref<1x3x16x128xf32, #tpu.memory_space<vmem>>, vector<1x1x8x128xf32>,
    }
    %c2_i32_0 = arith.constant 2 : i32
    return
  }
  func.func @transform_0(%arg0: i32) -> i32 {
    %c0_i32 = arith.constant 0 : i32
    %c0_i32_0 = arith.constant 0 : i32
    return %c0_i32 : i32
  }
  func.func @transform_1(%arg0: i32) -> i32 {
    %c0_i32 = arith.constant 0 : i32
    %c0_i32_0 = arith.constant 0 : i32
    return %c0_i32 : i32
  }
  func.func @transform_2(%arg0: i32) -> i32 {
    %c0_i32 = arith.constant 0 : i32
    %c0_i32_0 = arith.constant 0 : i32
    return %c0_i32 : i32
  }
  func.func @transform_3(%arg0: i32) -> (i32, i32, i32, i32) {
    %c0_i32 = arith.constant 0 : i32
    %c0_i32_0 = arith.constant 0 : i32
    %c0_i32_1 = arith.constant 0 : i32
    %c0_i32_2 = arith.constant 0 : i32
    return %arg0, %c0_i32, %c0_i32_0, %c0_i32_1 : i32, i32, i32, i32
  }
  func.func @transform_4(%arg0: i32) -> (i32, i32, i32, i32) {
    %c0_i32 = arith.constant 0 : i32
    %c0_i32_0 = arith.constant 0 : i32
    %c0_i32_1 = arith.constant 0 : i32
    %c0_i32_2 = arith.constant 0 : i32
    return %arg0, %c0_i32, %c0_i32_0, %c0_i32_1 : i32, i32, i32, i32
  }
}

</mosaic_0001>

<llo_original>
// kernel: randconv_forward.1
$region0: #{randconv_forward.1}
  #allocation0 [shape = 'u32[]', space=smem, size = 0x4, offset = 0x4, fixed_abs, tag = 'smem constant byte address 0x4 - core index']
  #allocation1 [shape = 'u32[144,128]{1,0:T(1,128)}', space=vmem, size = 0x12000, scoped, tag = 'internal scratch']
  %s0 = inlined_call_operand.vmem [shape: f32[81], index: 0, kind: input, shape index: {}]
  %s1 = inlined_call_operand.vmem [shape: f32[3], index: 1, kind: input, shape index: {}]
  %s2 = inlined_call_operand.vmem [shape: f32[6], index: 2, kind: input, shape index: {}]
  %s3 = inlined_call_operand.vmem [shape: f32[2,3,18,128], index: 3, kind: input, shape index: {}]
  %s4 = inlined_call_operand.vmem [shape: f32[2,3,16,128], index: 4, kind: output, shape index: {}]
  %s5 = sld [smem:[#allocation0]]
  $region68: #{randconv_forward.1} parent=0
    _
  %s7 = ssub.s32 1, %s5
  %s8 = scalar_select 0, %s7, %s5
  $region1: #{randconv_forward.1} parent=0
    #allocation2 [shape = 'u8[512]{0}', space=smem, size = 0x200, scoped, tag = 'input window, operand 0, single buffered']
    #allocation3 [shape = 's32[2]{0}', space=sflag, size = 0x8, scoped, tag = 'scoped memory for randconv_forward.1']
    #allocation4 [shape = 'u8[512]{0}', space=smem, size = 0x200, scoped, tag = 'input window, operand 1, single buffered']
    #allocation5 [shape = 's32[1]{0}', space=sflag, size = 0x4, scoped, tag = 'scoped memory for randconv_forward.1']
    #allocation6 [shape = 'u8[512]{0}', space=smem, size = 0x200, scoped, tag = 'input window, operand 2, single buffered']
    %9 = vsyncpa [#allocation3], 0
    %10 = vsyncpa [#allocation5], 0
    loop: start=0, step=1, limit=4
    $region2: #{randconv_forward.1} parent=1 // loop_pre_header
      _
    $region3: #{randconv_forward.1} parent=1 // loop_header
      %s12 = sphi 0, %s16
      %p13 = scmp.ge.s32.totalorder %s12, 4
      %s20 = sphi 0, %s20
      %s22 = sphi 0, %s20
      %s23 = sphi 0, %s22
      %s37 = sphi 0, %s23
      %s41 = sphi 0, %s41
      %s43 = sphi 0, %s41
      %s44 = sphi 0, %s43
      %s58 = sphi 0, %s44
      %s62 = sphi 0, %s62
      %s64 = sphi 0, %s62
      %s65 = sphi 0, %s64
      %s79 = sphi 0, %s65
      %s85 = sphi 0, %s87
      %s88 = sphi 0, %s85
      %s89 = sphi 0, %s88
      %s105 = sphi 0, %s89
      %s111 = sphi 0, %s113
      %s114 = sphi 0, %s111
      %s115 = sphi 0, %s114
      %s131 = sphi 0, %s115
    $region4: #{randconv_forward.1} parent=1 // loop_header_branch
      %15 = sbr.rel (%p13) target = $region8
    $region5: #{randconv_forward.1} parent=1 // loop_body
      %s17 = ssub.s32 %s12, 1
      %s18 = ssub.s32 %s12, 2
      %s19 = sadd.s32 %s12, 1
      %s21 = sadd.s32 %s20, 1
      %p24 = scmp.eq.s32.totalorder %s12, 1
      %p25 = scmp.ne.s32.totalorder %s20, %s22
      %p26 = scmp.eq.s32.totalorder %s12, 0
      %p27 = por %p25, %p26
      %p28 = scmp.ne.s32.totalorder %s20, %s22
      %p29 = scmp.eq.s32.totalorder %s17, 1
      %p30 = por %p28, %p29
      %p31 = scmp.ne.s32.totalorder %s22, %s23
      %p32 = scmp.eq.s32.totalorder %s17, 0
      %p33 = por %p31, %p32
      %p34 = scmp.ne.s32.totalorder %s22, %s23
      %p35 = scmp.eq.s32.totalorder %s18, 1
      %p36 = por %p34, %p35
      %p38 = scmp.ne.s32.totalorder %s23, %s37
      %p39 = scmp.eq.s32.totalorder %s18, 0
      %p40 = por %p38, %p39
      %s42 = sadd.s32 %s41, 1
      %p45 = scmp.eq.s32.totalorder %s12, 1
      %p46 = scmp.ne.s32.totalorder %s41, %s43
      %p47 = scmp.eq.s32.totalorder %s12, 0
      %p48 = por %p46, %p47
      %p49 = scmp.ne.s32.totalorder %s41, %s43
      %p50 = scmp.eq.s32.totalorder %s17, 1
      %p51 = por %p49, %p50
      %p52 = scmp.ne.s32.totalorder %s43, %s44
      %p53 = scmp.eq.s32.totalorder %s17, 0
      %p54 = por %p52, %p53
      %p55 = scmp.ne.s32.totalorder %s43, %s44
      %p56 = scmp.eq.s32.totalorder %s18, 1
      %p57 = por %p55, %p56
      %p59 = scmp.ne.s32.totalorder %s44, %s58
      %p60 = scmp.eq.s32.totalorder %s18, 0
      %p61 = por %p59, %p60
      %s63 = sadd.s32 %s62, 1
      %p66 = scmp.eq.s32.totalorder %s12, 1
      %p67 = scmp.ne.s32.totalorder %s62, %s64
      %p68 = scmp.eq.s32.totalorder %s12, 0
      %p69 = por %p67, %p68
      %p70 = scmp.ne.s32.totalorder %s62, %s64
      %p71 = scmp.eq.s32.totalorder %s17, 1
      %p72 = por %p70, %p71
      %p73 = scmp.ne.s32.totalorder %s64, %s65
      %p74 = scmp.eq.s32.totalorder %s17, 0
      %p75 = por %p73, %p74
      %p76 = scmp.ne.s32.totalorder %s64, %s65
      %p77 = scmp.eq.s32.totalorder %s18, 1
      %p78 = por %p76, %p77
      %p80 = scmp.ne.s32.totalorder %s65, %s79
      %p81 = scmp.eq.s32.totalorder %s18, 0
      %p82 = por %p80, %p81
      %s83 = ssub.s32 %s12, %s19
      %p84 = scmp.eq.s32.totalorder %s83, 0
      %s86 = sadd.s32 %s85, 1
      %s87 = scalar_select %p84, %s85, %s86
      %p90 = pneg %p84
      %p91 = scmp.eq.s32.totalorder %s12, 1
      %p92 = por %p90, %p91
      %p93 = scmp.ne.s32.totalorder %s85, %s88
      %p94 = scmp.eq.s32.totalorder %s12, 0
      %p95 = por %p93, %p94
      %p96 = scmp.ne.s32.totalorder %s85, %s88
      %p97 = scmp.eq.s32.totalorder %s17, 1
      %p98 = por %p96, %p97
      %p99 = scmp.ne.s32.totalorder %s88, %s89
      %p100 = scmp.eq.s32.totalorder %s17, 0
      %p101 = por %p99, %p100
      %p102 = scmp.ne.s32.totalorder %s88, %s89
      %p103 = scmp.eq.s32.totalorder %s18, 1
      %p104 = por %p102, %p103
      %p106 = scmp.ne.s32.totalorder %s89, %s105
      %p107 = scmp.eq.s32.totalorder %s18, 0
      %p108 = por %p106, %p107
      %s109 = ssub.s32 %s12, %s19
      %p110 = scmp.eq.s32.totalorder %s109, 0
      %s112 = sadd.s32 %s111, 1
      %s113 = scalar_select %p110, %s111, %s112
      %p116 = pneg %p110
      %p117 = scmp.eq.s32.totalorder %s12, 1
      %p118 = por %p116, %p117
      %p119 = scmp.ne.s32.totalorder %s111, %s114
      %p120 = scmp.eq.s32.totalorder %s12, 0
      %p121 = por %p119, %p120
      %p122 = scmp.ne.s32.totalorder %s111, %s114
      %p123 = scmp.eq.s32.totalorder %s17, 1
      %p124 = por %p122, %p123
      %p125 = scmp.ne.s32.totalorder %s114, %s115
      %p126 = scmp.eq.s32.totalorder %s17, 0
      %p127 = por %p125, %p126
      %p128 = scmp.ne.s32.totalorder %s114, %s115
      %p129 = scmp.eq.s32.totalorder %s18, 1
      %p130 = por %p128, %p129
      %p132 = scmp.ne.s32.totalorder %s115, %s131
      %p133 = scmp.eq.s32.totalorder %s18, 0
      %p134 = por %p132, %p133
      %p135 = scmp.le.s32.totalorder 1, %s12
      %p136 = scmp.lt.s32.totalorder %s12, 3
      %p137 = pnand %p135, %p136
      %p138 = pneg %p137
      // Predicated region
      $region9: #{randconv_forward.1} parent=5 // pred_check
        _
      $region10: #{randconv_forward.1} parent=5 // pred_check_branch
        %140 = sbr.rel (%p137) target = $region12
      $region11: #{randconv_forward.1} parent=5 // pred_region
        %s141 = ssub.s32 %s12, 1
        // Predicated region
        $region13: #{randconv_forward.1} parent=11 // pred_check
          %p142 = pneg %p33
        $region14: #{randconv_forward.1} parent=11 // pred_check_branch
          %144 = sbr.rel (%p142) target = $region16
        $region15: #{randconv_forward.1} parent=11 // pred_region
          %s146 = ssub.s32 16, 16
          %147 = vsyncadd [#allocation3], %s146
          %s149 = sshll.u32 %s0, 4
          %s150 = int_to_ptr.vmem [resolvable:$true] %s149
          %152 = dma.vmem_to_smem %s150, 16, [#allocation2], [#allocation3]
        $region16: #{randconv_forward.1} parent=11 // pred_fallthru
          _
        // Predicated region
        $region17: #{randconv_forward.1} parent=11 // pred_check
          %p153 = pneg %p54
        $region18: #{randconv_forward.1} parent=11 // pred_check_branch
          %155 = sbr.rel (%p153) target = $region20
        $region19: #{randconv_forward.1} parent=11 // pred_region
          %s157 = ssub.s32 16, 16
          %158 = vsyncadd [#allocation5], %s157
          %s160 = sshll.u32 %s1, 4
          %s161 = int_to_ptr.vmem [resolvable:$true] %s160
          %163 = dma.vmem_to_smem %s161, 16, [#allocation4], [#allocation5]
        $region20: #{randconv_forward.1} parent=11 // pred_fallthru
          _
        // Predicated region
        $region21: #{randconv_forward.1} parent=11 // pred_check
          %p164 = pneg %p75
        $region22: #{randconv_forward.1} parent=11 // pred_check_branch
          %166 = sbr.rel (%p164) target = $region24
        $region23: #{randconv_forward.1} parent=11 // pred_region
          %s168 = ssub.s32 16, 16
          %169 = vsyncadd [#allocation5], %s168
          %s171 = sshll.u32 %s2, 4
          %s172 = int_to_ptr.vmem [resolvable:$true] %s171
          %174 = dma.vmem_to_smem %s172, 16, [#allocation6], [#allocation5]
        $region24: #{randconv_forward.1} parent=11 // pred_fallthru
          _
      $region12: #{randconv_forward.1} parent=5 // pred_fallthru
        _
      %p175 = scmp.lt.s32.totalorder %s12, 2
      // Predicated region
      $region25: #{randconv_forward.1} parent=5 // pred_check
        %p176 = pneg %p175
      $region26: #{randconv_forward.1} parent=5 // pred_check_branch
        %178 = sbr.rel (%p176) target = $region28
      $region27: #{randconv_forward.1} parent=5 // pred_region
        // Predicated region
        $region29: #{randconv_forward.1} parent=27 // pred_check
          %p179 = pneg %p95
        $region30: #{randconv_forward.1} parent=27 // pred_check_branch
          %181 = sbr.rel (%p179) target = $region32
        $region31: #{randconv_forward.1} parent=27 // pred_region
          %p182 = scmp.lt.s32.totalorder %s12, 1
          %s183 = scalar_select %p182, %s12, 1
          %s184 = smul.addr %s183, 9
          %s185 = smul.addr %s184, 8
          %s186 = scalar_lea.vmem %s3, %s185
        $region32: #{randconv_forward.1} parent=27 // pred_fallthru
          _
      $region28: #{randconv_forward.1} parent=5 // pred_fallthru
        _
      %p187 = scmp.le.s32.totalorder 1, %s12
      %p188 = scmp.lt.s32.totalorder %s12, 3
      %p189 = pnand %p187, %p188
      %p190 = pneg %p189
      // Predicated region
      $region33: #{randconv_forward.1} parent=5 // pred_check
        _
      $region34: #{randconv_forward.1} parent=5 // pred_check_branch
        %192 = sbr.rel (%p189) target = $region36
      $region35: #{randconv_forward.1} parent=5 // pred_region
        %s193 = ssub.s32 %s12, 1
        // Predicated region
        $region37: #{randconv_forward.1} parent=35 // pred_check
          %p194 = pneg %p33
        $region38: #{randconv_forward.1} parent=35 // pred_check_branch
          %196 = sbr.rel (%p194) target = $region40
        $region39: #{randconv_forward.1} parent=35 // pred_region
          %197 = dma.done [#allocation3], 16
        $region40: #{randconv_forward.1} parent=35 // pred_fallthru
          _
        // Predicated region
        $region41: #{randconv_forward.1} parent=35 // pred_check
          %p198 = pneg %p54
        $region42: #{randconv_forward.1} parent=35 // pred_check_branch
          %200 = sbr.rel (%p198) target = $region44
        $region43: #{randconv_forward.1} parent=35 // pred_region
          %201 = dma.done [#allocation5], 16
        $region44: #{randconv_forward.1} parent=35 // pred_fallthru
          _
        // Predicated region
        $region45: #{randconv_forward.1} parent=35 // pred_check
          %p202 = pneg %p75
        $region46: #{randconv_forward.1} parent=35 // pred_check_branch
          %204 = sbr.rel (%p202) target = $region48
        $region47: #{randconv_forward.1} parent=35 // pred_region
          %205 = dma.done [#allocation5], 16
        $region48: #{randconv_forward.1} parent=35 // pred_fallthru
          _
        %206 = sfence
        %p207 = pneg %p33
        %p208 = pneg %p30
        %p209 = pneg %p54
        %p210 = pneg %p51
        %p211 = pneg %p75
        %p212 = pneg %p72
        %p213 = scmp.lt.s32.totalorder %s17, 1
        %s214 = scalar_select %p213, %s17, 1
        %s215 = smul.addr %s214, 9
        %s216 = smul.addr %s215, 8
        %s217 = scalar_lea.vmem %s3, %s216
        %p218 = pneg %p101
        %p219 = pneg %p98
        %p220 = pneg %p127
        %p221 = pneg %p124
        %p222 = scmp.lt.s32.totalorder %s17, 1
        %s223 = scalar_select %p222, %s17, 1
        %s224 = smul.addr %s223, 6
        %s225 = smul.addr %s224, 8
        %s226 = scalar_lea.vmem %s4, %s225
        %p227 = scmp.lt.s32.totalorder %s17, 1
        %s228 = scalar_select %p227, %s17, 1
        %s229 = smul.addr %s228, 9
        %s230 = smul.addr %s229, 8
        %s231 = scalar_lea.vmem %s3, %s230
        %p232 = scmp.lt.s32.totalorder %s17, 1
        %s233 = scalar_select %p232, %s17, 1
        %s234 = smul.addr %s233, 6
        %s235 = smul.addr %s234, 8
        %s236 = scalar_lea.vmem %s4, %s235
        loop: start=0, step=1, limit=2
        $region49: #{randconv_forward.1} parent=35 // loop_pre_header
          _
        $region50: #{randconv_forward.1} parent=35 // loop_header
          %s238 = sphi 0, %s242
          %p239 = scmp.ge.s32.totalorder %s238, 2
        $region51: #{randconv_forward.1} parent=35 // loop_header_branch
          %241 = sbr.rel (%p239) target = $region55
        $region52: #{randconv_forward.1} parent=35 // loop_body
          %s243 = smul.u32 %s238, 8
          %s244 = sld [smem:[#allocation4]]
          %v245 = vstv %s244
          %s246 = sld [smem:[#allocation4 + $0x1]]
          %v247 = vstv %s246
          %s248 = sld [smem:[#allocation4 + $0x2]]
          %v249 = vstv %s248
          %s250 = scalar_lea.vmem %s231, %s243
          %v251 = vld [vmem:[%s250] sm:$0xff]
          %252 = vrot.lane.b32.xlu0 %v251, 127
          %v253 = vpop.permute.xlu0 %252
          %254 = vrot.lane.b32.xlu0 %v251, 126
          %v255 = vpop.permute.xlu0 %254
          %s256 = sld [smem:[#allocation2]]
          %v257 = vstv %s256
          %v258 = vmul.f32 %v257, %v251
          %v259 = vadd.f32 %v245, %v258
          %s260 = sld [smem:[#allocation2 + $0x1b]]
          %v261 = vstv %s260
          %v262 = vmul.f32 %v261, %v251
          %v263 = vadd.f32 %v247, %v262
          %s264 = sld [smem:[#allocation2 + $0x36]]
          %v265 = vstv %s264
          %v266 = vmul.f32 %v265, %v251
          %v267 = vadd.f32 %v249, %v266
          %s268 = sld [smem:[#allocation2 + $0x1]]
          %v269 = vstv %s268
          %v270 = vmul.f32 %v269, %v253
          %v271 = vadd.f32 %v259, %v270
          %s272 = sld [smem:[#allocation2 + $0x1c]]
          %v273 = vstv %s272
          %v274 = vmul.f32 %v273, %v253
          %v275 = vadd.f32 %v263, %v274
          %s276 = sld [smem:[#allocation2 + $0x37]]
          %v277 = vstv %s276
          %v278 = vmul.f32 %v277, %v253
          %v279 = vadd.f32 %v267, %v278
          %s280 = sld [smem:[#allocation2 + $0x2]]
          %v281 = vstv %s280
          %v282 = vmul.f32 %v281, %v255
          %v283 = vadd.f32 %v271, %v282
          %s284 = sld [smem:[#allocation2 + $0x1d]]
          %v285 = vstv %s284
          %v286 = vmul.f32 %v285, %v255
          %v287 = vadd.f32 %v275, %v286
          %s288 = sld [smem:[#allocation2 + $0x38]]
          %v289 = vstv %s288
          %v290 = vmul.f32 %v289, %v255
          %v291 = vadd.f32 %v279, %v290
          %s292 = sadd.s32 %s243, 1
          %s293 = scalar_lea.vmem %s231, %s292
          %v294 = vld [vmem:[%s293] sm:$0xff]
          %295 = vrot.lane.b32.xlu0 %v294, 127
          %v296 = vpop.permute.xlu0 %295
          %297 = vrot.lane.b32.xlu0 %v294, 126
          %v298 = vpop.permute.xlu0 %297
          %s299 = sld [smem:[#allocation2 + $0x3]]
          %v300 = vstv %s299
          %v301 = vmul.f32 %v300, %v294
          %v302 = vadd.f32 %v283, %v301
          %s303 = sld [smem:[#allocation2 + $0x1e]]
          %v304 = vstv %s303
          %v305 = vmul.f32 %v304, %v294
          %v306 = vadd.f32 %v287, %v305
          %s307 = sld [smem:[#allocation2 + $0x39]]
          %v308 = vstv %s307
          %v309 = vmul.f32 %v308, %v294
          %v310 = vadd.f32 %v291, %v309
          %s311 = sld [smem:[#allocation2 + $0x4]]
          %v312 = vstv %s311
          %v313 = vmul.f32 %v312, %v296
          %v314 = vadd.f32 %v302, %v313
          %s315 = sld [smem:[#allocation2 + $0x1f]]
          %v316 = vstv %s315
          %v317 = vmul.f32 %v316, %v296
          %v318 = vadd.f32 %v306, %v317
          %s319 = sld [smem:[#allocation2 + $0x3a]]
          %v320 = vstv %s319
          %v321 = vmul.f32 %v320, %v296
          %v322 = vadd.f32 %v310, %v321
          %s323 = sld [smem:[#allocation2 + $0x5]]
          %v324 = vstv %s323
          %v325 = vmul.f32 %v324, %v298
          %v326 = vadd.f32 %v314, %v325
          %s327 = sld [smem:[#allocation2 + $0x20]]
          %v328 = vstv %s327
          %v329 = vmul.f32 %v328, %v298
          %v330 = vadd.f32 %v318, %v329
          %s331 = sld [smem:[#allocation2 + $0x3b]]
          %v332 = vstv %s331
          %v333 = vmul.f32 %v332, %v298
          %v334 = vadd.f32 %v322, %v333
          %s335 = sadd.s32 %s243, 2
          %s336 = scalar_lea.vmem %s231, %s335
          %v337 = vld [vmem:[%s336] sm:$0xff]
          %338 = vrot.lane.b32.xlu0 %v337, 127
          %v339 = vpop.permute.xlu0 %338
          %340 = vrot.lane.b32.xlu0 %v337, 126
          %v341 = vpop.permute.xlu0 %340
          %s342 = sld [smem:[#allocation2 + $0x6]]
          %v343 = vstv %s342
          %v344 = vmul.f32 %v343, %v337
          %v345 = vadd.f32 %v326, %v344
          %s346 = sld [smem:[#allocation2 + $0x21]]
          %v347 = vstv %s346
          %v348 = vmul.f32 %v347, %v337
          %v349 = vadd.f32 %v330, %v348
          %s350 = sld [smem:[#allocation2 + $0x3c]]
          %v351 = vstv %s350
          %v352 = vmul.f32 %v351, %v337
          %v353 = vadd.f32 %v334, %v352
          %s354 = sld [smem:[#allocation2 + $0x7]]
          %v355 = vstv %s354
          %v356 = vmul.f32 %v355, %v339
          %v357 = vadd.f32 %v345, %v356
          %s358 = sld [smem:[#allocation2 + $0x22]]
          %v359 = vstv %s358
          %v360 = vmul.f32 %v359, %v339
          %v361 = vadd.f32 %v349, %v360
          %s362 = sld [smem:[#allocation2 + $0x3d]]
          %v363 = vstv %s362
          %v364 = vmul.f32 %v363, %v339
          %v365 = vadd.f32 %v353, %v364
          %s366 = sld [smem:[#allocation2 + $0x8]]
          %v367 = vstv %s366
          %v368 = vmul.f32 %v367, %v341
          %v369 = vadd.f32 %v357, %v368
          %s370 = sld [smem:[#allocation2 + $0x23]]
          %v371 = vstv %s370
          %v372 = vmul.f32 %v371, %v341
          %v373 = vadd.f32 %v361, %v372
          %s374 = sld [smem:[#allocation2 + $0x3e]]
          %v375 = vstv %s374
          %v376 = vmul.f32 %v375, %v341
          %v377 = vadd.f32 %v365, %v376
          %s378 = sadd.s32 %s243, 24
          %s379 = scalar_lea.vmem %s231, %s378
          %v380 = vld [vmem:[%s379] sm:$0xff]
          %381 = vrot.lane.b32.xlu0 %v380, 127
          %v382 = vpop.permute.xlu0 %381
          %383 = vrot.lane.b32.xlu0 %v380, 126
          %v384 = vpop.permute.xlu0 %383
          %s385 = sld [smem:[#allocation2 + $0x9]]
          %v386 = vstv %s385
          %v387 = vmul.f32 %v386, %v380
          %v388 = vadd.f32 %v369, %v387
          %s389 = sld [smem:[#allocation2 + $0x24]]
          %v390 = vstv %s389
          %v391 = vmul.f32 %v390, %v380
          %v392 = vadd.f32 %v373, %v391
          %s393 = sld [smem:[#allocation2 + $0x3f]]
          %v394 = vstv %s393
          %v395 = vmul.f32 %v394, %v380
          %v396 = vadd.f32 %v377, %v395
          %s397 = sld [smem:[#allocation2 + $0xa]]
          %v398 = vstv %s397
          %v399 = vmul.f32 %v398, %v382
          %v400 = vadd.f32 %v388, %v399
          %s401 = sld [smem:[#allocation2 + $0x25]]
          %v402 = vstv %s401
          %v403 = vmul.f32 %v402, %v382
          %v404 = vadd.f32 %v392, %v403
          %s405 = sld [smem:[#allocation2 + $0x40]]
          %v406 = vstv %s405
          %v407 = vmul.f32 %v406, %v382
          %v408 = vadd.f32 %v396, %v407
          %s409 = sld [smem:[#allocation2 + $0xb]]
          %v410 = vstv %s409
          %v411 = vmul.f32 %v410, %v384
          %v412 = vadd.f32 %v400, %v411
          %s413 = sld [smem:[#allocation2 + $0x26]]
          %v414 = vstv %s413
          %v415 = vmul.f32 %v414, %v384
          %v416 = vadd.f32 %v404, %v415
          %s417 = sld [smem:[#allocation2 + $0x41]]
          %v418 = vstv %s417
          %v419 = vmul.f32 %v418, %v384
          %v420 = vadd.f32 %v408, %v419
          %s421 = sadd.s32 %s292, 24
          %s422 = scalar_lea.vmem %s231, %s421
          %v423 = vld [vmem:[%s422] sm:$0xff]
          %424 = vrot.lane.b32.xlu0 %v423, 127
          %v425 = vpop.permute.xlu0 %424
          %426 = vrot.lane.b32.xlu0 %v423, 126
          %v427 = vpop.permute.xlu0 %426
          %s428 = sld [smem:[#allocation2 + $0xc]]
          %v429 = vstv %s428
          %v430 = vmul.f32 %v429, %v423
          %v431 = vadd.f32 %v412, %v430
          %s432 = sld [smem:[#allocation2 + $0x27]]
          %v433 = vstv %s432
          %v434 = vmul.f32 %v433, %v423
          %v435 = vadd.f32 %v416, %v434
          %s436 = sld [smem:[#allocation2 + $0x42]]
          %v437 = vstv %s436
          %v438 = vmul.f32 %v437, %v423
          %v439 = vadd.f32 %v420, %v438
          %s440 = sld [smem:[#allocation2 + $0xd]]
          %v441 = vstv %s440
          %v442 = vmul.f32 %v441, %v425
          %v443 = vadd.f32 %v431, %v442
          %s444 = sld [smem:[#allocation2 + $0x28]]
          %v445 = vstv %s444
          %v446 = vmul.f32 %v445, %v425
          %v447 = vadd.f32 %v435, %v446
          %s448 = sld [smem:[#allocation2 + $0x43]]
          %v449 = vstv %s448
          %v450 = vmul.f32 %v449, %v425
          %v451 = vadd.f32 %v439, %v450
          %s452 = sld [smem:[#allocation2 + $0xe]]
          %v453 = vstv %s452
          %v454 = vmul.f32 %v453, %v427
          %v455 = vadd.f32 %v443, %v454
          %s456 = sld [smem:[#allocation2 + $0x29]]
          %v457 = vstv %s456
          %v458 = vmul.f32 %v457, %v427
          %v459 = vadd.f32 %v447, %v458
          %s460 = sld [smem:[#allocation2 + $0x44]]
          %v461 = vstv %s460
          %v462 = vmul.f32 %v461, %v427
          %v463 = vadd.f32 %v451, %v462
          %s464 = sadd.s32 %s335, 24
          %s465 = scalar_lea.vmem %s231, %s464
          %v466 = vld [vmem:[%s465] sm:$0xff]
          %467 = vrot.lane.b32.xlu0 %v466, 127
          %v468 = vpop.permute.xlu0 %467
          %469 = vrot.lane.b32.xlu0 %v466, 126
          %v470 = vpop.permute.xlu0 %469
          %s471 = sld [smem:[#allocation2 + $0xf]]
          %v472 = vstv %s471
          %v473 = vmul.f32 %v472, %v466
          %v474 = vadd.f32 %v455, %v473
          %s475 = sld [smem:[#allocation2 + $0x2a]]
          %v476 = vstv %s475
          %v477 = vmul.f32 %v476, %v466
          %v478 = vadd.f32 %v459, %v477
          %s479 = sld [smem:[#allocation2 + $0x45]]
          %v480 = vstv %s479
          %v481 = vmul.f32 %v480, %v466
          %v482 = vadd.f32 %v463, %v481
          %s483 = sld [smem:[#allocation2 + $0x10]]
          %v484 = vstv %s483
          %v485 = vmul.f32 %v484, %v468
          %v486 = vadd.f32 %v474, %v485
          %s487 = sld [smem:[#allocation2 + $0x2b]]
          %v488 = vstv %s487
          %v489 = vmul.f32 %v488, %v468
          %v490 = vadd.f32 %v478, %v489
          %s491 = sld [smem:[#allocation2 + $0x46]]
          %v492 = vstv %s491
          %v493 = vmul.f32 %v492, %v468
          %v494 = vadd.f32 %v482, %v493
          %s495 = sld [smem:[#allocation2 + $0x11]]
          %v496 = vstv %s495
          %v497 = vmul.f32 %v496, %v470
          %v498 = vadd.f32 %v486, %v497
          %s499 = sld [smem:[#allocation2 + $0x2c]]
          %v500 = vstv %s499
          %v501 = vmul.f32 %v500, %v470
          %v502 = vadd.f32 %v490, %v501
          %s503 = sld [smem:[#allocation2 + $0x47]]
          %v504 = vstv %s503
          %v505 = vmul.f32 %v504, %v470
          %v506 = vadd.f32 %v494, %v505
          %s507 = sadd.s32 %s243, 48
          %s508 = scalar_lea.vmem %s231, %s507
          %v509 = vld [vmem:[%s508] sm:$0xff]
          %510 = vrot.lane.b32.xlu0 %v509, 127
          %v511 = vpop.permute.xlu0 %510
          %512 = vrot.lane.b32.xlu0 %v509, 126
          %v513 = vpop.permute.xlu0 %512
          %s514 = sld [smem:[#allocation2 + $0x12]]
          %v515 = vstv %s514
          %v516 = vmul.f32 %v515, %v509
          %v517 = vadd.f32 %v498, %v516
          %s518 = sld [smem:[#allocation2 + $0x2d]]
          %v519 = vstv %s518
          %v520 = vmul.f32 %v519, %v509
          %v521 = vadd.f32 %v502, %v520
          %s522 = sld [smem:[#allocation2 + $0x48]]
          %v523 = vstv %s522
          %v524 = vmul.f32 %v523, %v509
          %v525 = vadd.f32 %v506, %v524
          %s526 = sld [smem:[#allocation2 + $0x13]]
          %v527 = vstv %s526
          %v528 = vmul.f32 %v527, %v511
          %v529 = vadd.f32 %v517, %v528
          %s530 = sld [smem:[#allocation2 + $0x2e]]
          %v531 = vstv %s530
          %v532 = vmul.f32 %v531, %v511
          %v533 = vadd.f32 %v521, %v532
          %s534 = sld [smem:[#allocation2 + $0x49]]
          %v535 = vstv %s534
          %v536 = vmul.f32 %v535, %v511
          %v537 = vadd.f32 %v525, %v536
          %s538 = sld [smem:[#allocation2 + $0x14]]
          %v539 = vstv %s538
          %v540 = vmul.f32 %v539, %v513
          %v541 = vadd.f32 %v529, %v540
          %s542 = sld [smem:[#allocation2 + $0x2f]]
          %v543 = vstv %s542
          %v544 = vmul.f32 %v543, %v513
          %v545 = vadd.f32 %v533, %v544
          %s546 = sld [smem:[#allocation2 + $0x4a]]
          %v547 = vstv %s546
          %v548 = vmul.f32 %v547, %v513
          %v549 = vadd.f32 %v537, %v548
          %s550 = sadd.s32 %s292, 48
          %s551 = scalar_lea.vmem %s231, %s550
          %v552 = vld [vmem:[%s551] sm:$0xff]
          %553 = vrot.lane.b32.xlu0 %v552, 127
          %v554 = vpop.permute.xlu0 %553
          %555 = vrot.lane.b32.xlu0 %v552, 126
          %v556 = vpop.permute.xlu0 %555
          %s557 = sld [smem:[#allocation2 + $0x15]]
          %v558 = vstv %s557
          %v559 = vmul.f32 %v558, %v552
          %v560 = vadd.f32 %v541, %v559
          %s561 = sld [smem:[#allocation2 + $0x30]]
          %v562 = vstv %s561
          %v563 = vmul.f32 %v562, %v552
          %v564 = vadd.f32 %v545, %v563
          %s565 = sld [smem:[#allocation2 + $0x4b]]
          %v566 = vstv %s565
          %v567 = vmul.f32 %v566, %v552
          %v568 = vadd.f32 %v549, %v567
          %s569 = sld [smem:[#allocation2 + $0x16]]
          %v570 = vstv %s569
          %v571 = vmul.f32 %v570, %v554
          %v572 = vadd.f32 %v560, %v571
          %s573 = sld [smem:[#allocation2 + $0x31]]
          %v574 = vstv %s573
          %v575 = vmul.f32 %v574, %v554
          %v576 = vadd.f32 %v564, %v575
          %s577 = sld [smem:[#allocation2 + $0x4c]]
          %v578 = vstv %s577
          %v579 = vmul.f32 %v578, %v554
          %v580 = vadd.f32 %v568, %v579
          %s581 = sld [smem:[#allocation2 + $0x17]]
          %v582 = vstv %s581
          %v583 = vmul.f32 %v582, %v556
          %v584 = vadd.f32 %v572, %v583
          %s585 = sld [smem:[#allocation2 + $0x32]]
          %v586 = vstv %s585
          %v587 = vmul.f32 %v586, %v556
          %v588 = vadd.f32 %v576, %v587
          %s589 = sld [smem:[#allocation2 + $0x4d]]
          %v590 = vstv %s589
          %v591 = vmul.f32 %v590, %v556
          %v592 = vadd.f32 %v580, %v591
          %s593 = sadd.s32 %s335, 48
          %s594 = scalar_lea.vmem %s231, %s593
          %v595 = vld [vmem:[%s594] sm:$0xff]
          %596 = vrot.lane.b32.xlu0 %v595, 127
          %v597 = vpop.permute.xlu0 %596
          %598 = vrot.lane.b32.xlu0 %v595, 126
          %v599 = vpop.permute.xlu0 %598
          %s600 = sld [smem:[#allocation2 + $0x18]]
          %v601 = vstv %s600
          %v602 = vmul.f32 %v601, %v595
          %v603 = vadd.f32 %v584, %v602
          %s604 = sld [smem:[#allocation2 + $0x33]]
          %v605 = vstv %s604
          %v606 = vmul.f32 %v605, %v595
          %v607 = vadd.f32 %v588, %v606
          %s608 = sld [smem:[#allocation2 + $0x4e]]
          %v609 = vstv %s608
          %v610 = vmul.f32 %v609, %v595
          %v611 = vadd.f32 %v592, %v610
          %s612 = sld [smem:[#allocation2 + $0x19]]
          %v613 = vstv %s612
          %v614 = vmul.f32 %v613, %v597
          %v615 = vadd.f32 %v603, %v614
          %s616 = sld [smem:[#allocation2 + $0x34]]
          %v617 = vstv %s616
          %v618 = vmul.f32 %v617, %v597
          %v619 = vadd.f32 %v607, %v618
          %s620 = sld [smem:[#allocation2 + $0x4f]]
          %v621 = vstv %s620
          %v622 = vmul.f32 %v621, %v597
          %v623 = vadd.f32 %v611, %v622
          %s624 = sld [smem:[#allocation2 + $0x1a]]
          %v625 = vstv %s624
          %v626 = vmul.f32 %v625, %v599
          %v627 = vadd.f32 %v615, %v626
          %s628 = sld [smem:[#allocation2 + $0x35]]
          %v629 = vstv %s628
          %v630 = vmul.f32 %v629, %v599
          %v631 = vadd.f32 %v619, %v630
          %s632 = sld [smem:[#allocation2 + $0x50]]
          %v633 = vstv %s632
          %v634 = vmul.f32 %v633, %v599
          %v635 = vadd.f32 %v623, %v634
          %s636 = sld [smem:[#allocation6 + $0x3]]
          %v637 = vstv %s636
          %v638 = vmin.f32 %v627, %v637
          %s639 = sld [smem:[#allocation6]]
          %v640 = vstv %s639
          %v641 = vmax.f32 %v638, %v640
          %s642 = scalar_lea.vmem %s236, %s243
          %643 = vst [vmem:[%s642] sm:$0xff] %v641
          %s644 = sld [smem:[#allocation6 + $0x4]]
          %v645 = vstv %s644
          %v646 = vmin.f32 %v631, %v645
          %s647 = sld [smem:[#allocation6 + $0x1]]
          %v648 = vstv %s647
          %v649 = vmax.f32 %v646, %v648
          %s650 = sadd.s32 %s243, 16
          %s651 = scalar_lea.vmem %s236, %s650
          %652 = vst [vmem:[%s651] sm:$0xff] %v649
          %s653 = sld [smem:[#allocation6 + $0x5]]
          %v654 = vstv %s653
          %v655 = vmin.f32 %v635, %v654
          %s656 = sld [smem:[#allocation6 + $0x2]]
          %v657 = vstv %s656
          %v658 = vmax.f32 %v655, %v657
          %s659 = sadd.s32 %s243, 32
          %s660 = scalar_lea.vmem %s236, %s659
          %661 = vst [vmem:[%s660] sm:$0xff] %v658
        $region53: #{randconv_forward.1} parent=35 // loop_footer
          %s242 = sadd.s32 1, %s238
        $region54: #{randconv_forward.1} parent=35 // loop_footer_branch
          %237 = sbr.rel target = $region50
        $region55: #{randconv_forward.1} parent=35 // loop_exit
          _
        %p662 = scmp.lt.s32.totalorder %s17, 1
        %s663 = scalar_select %p662, %s17, 1
        %s664 = smul.addr %s663, 6
        %s665 = smul.addr %s664, 8
        %s666 = scalar_lea.vmem %s4, %s665
        // Predicated region
        $region56: #{randconv_forward.1} parent=35 // pred_check
          %p667 = pneg %p124
        $region57: #{randconv_forward.1} parent=35 // pred_check_branch
          %669 = sbr.rel (%p667) target = $region59
        $region58: #{randconv_forward.1} parent=35 // pred_region
          _
        $region59: #{randconv_forward.1} parent=35 // pred_fallthru
          _
      $region36: #{randconv_forward.1} parent=5 // pred_fallthru
        _
      %p670 = scmp.le.s32.totalorder 2, %s12
      // Predicated region
      $region60: #{randconv_forward.1} parent=5 // pred_check
        %p671 = pneg %p670
      $region61: #{randconv_forward.1} parent=5 // pred_check_branch
        %673 = sbr.rel (%p671) target = $region63
      $region62: #{randconv_forward.1} parent=5 // pred_region
        %s674 = ssub.s32 %s12, 2
        // Predicated region
        $region64: #{randconv_forward.1} parent=62 // pred_check
          %p675 = pneg %p130
        $region65: #{randconv_forward.1} parent=62 // pred_check_branch
          %677 = sbr.rel (%p675) target = $region67
        $region66: #{randconv_forward.1} parent=62 // pred_region
          %p678 = scmp.lt.s32.totalorder %s18, 1
          %s679 = scalar_select %p678, %s18, 1
          %s680 = smul.addr %s679, 6
          %s681 = smul.addr %s680, 8
          %s682 = scalar_lea.vmem %s4, %s681
        $region67: #{randconv_forward.1} parent=62 // pred_fallthru
          _
      $region63: #{randconv_forward.1} parent=5 // pred_fallthru
        _
    $region6: #{randconv_forward.1} parent=1 // loop_footer
      %s16 = sadd.s32 1, %s12
    $region7: #{randconv_forward.1} parent=1 // loop_footer_branch
      %11 = sbr.rel target = $region3
    $region8: #{randconv_forward.1} parent=1 // loop_exit
      _
    %683 = vsyncpa [#allocation3], 1
    %s684 = scalar_lea.sflag [#allocation3], 1
    %685 = vsyncpa %s684, 1
    %686 = vsyncpa [#allocation5], 1

</llo_original>
